<compile_context>
chip_gen: v7x
topology: tpu7x:2x2x1
jax: 0.10.0
libtpu: 0.0.40
codegen_flags: <defaults>
</compile_context>

<pallas_src>
import jax
import jax.numpy as jnp
from jax.experimental import pallas as pl
from jax.experimental.pallas import tpu as pltpu

LANE = 128


def gtconv_kernel(w_ref, a_ref, o_ref):
    # w_ref: (C_out, C_in) pre-softmaxed weights (resident across the grid)
    # a_ref: (C_in, TILE_NN)   o_ref: (C_out, TILE_NN)
    o_ref[...] = jnp.dot(
        w_ref[...],
        a_ref[...],
        preferred_element_type=jnp.float32,
        precision=jax.lax.Precision.HIGHEST,
    ).astype(o_ref.dtype)


def _pad_up(x, m):
    return ((x + m - 1) // m) * m


def _num_tensorcores():
    """Best-effort TensorCores-per-chip (v7x has 2; v5e/v6e have 1)."""
    try:
        kind = str(jax.devices()[0].device_kind).lower()
        if "v7" in kind:
            return 2
    except Exception:
        pass
    return 1


def gtconv_forward(A, weight, *, vmem_budget_bytes=16 * 1024 * 1024):
    """A: (C_in, N, N); weight: (C_out, C_in, 1, 1). Returns (C_out, N, N) in A.dtype."""
    C_in, N, M = A.shape
    C_out = weight.shape[0]
    NN = N * M
    itemsize = jnp.dtype(A.dtype).itemsize

    # Softmax over in_channels (dim=1 of the (C_out, C_in, 1, 1) conv weight),
    # computed once in the wrapper instead of every grid step.
    w_sm = jax.nn.softmax(
        weight.reshape(C_out, C_in).astype(jnp.float32), axis=-1)
    if A.dtype == jnp.bfloat16:
        # Keep the dot on the native bf16 MXU path (still f32 accumulation).
        w_sm = w_sm.astype(jnp.bfloat16)

    # Lane-dense flattened view; contiguous reshape => no extra HBM pass.
    a_flat = A.reshape(C_in, NN)

    # Per-step VMEM: blocks are physically padded to the dtype's sublane count
    # (32 bytes of a lane-column) and double-buffered.
    sublane = max(1, 32 // itemsize)          # 8 for f32, 16 for bf16
    bytes_per_lane = 2 * (_pad_up(C_in, sublane) + _pad_up(C_out, sublane)) * itemsize
    cap_lanes = max(LANE, (vmem_budget_bytes // bytes_per_lane) // LANE * LANE)

    if NN <= cap_lanes:
        # Single full-extent block: (8,128) rule satisfied by "equals full dim".
        tile_nn = NN
    else:
        tile_nn = cap_lanes  # multiple of 128; last block may be ragged (masked)

    steps = pl.cdiv(NN, tile_nn)
    num_tc = _num_tensorcores()
    if num_tc > 1 and NN >= 16 * LANE and steps % num_tc != 0:
        # Balance the "parallel" grid axis across v7x's 2 TensorCores.
        target = _pad_up(steps, num_tc)
        tile_nn = min(tile_nn, _pad_up(pl.cdiv(NN, target), LANE))
        steps = pl.cdiv(NN, tile_nn)
    grid = (steps,)

    cost = pl.CostEstimate(
        flops=2 * C_out * C_in * NN,
        transcendentals=0,
        bytes_accessed=(C_in + C_out) * NN * itemsize
        + C_out * C_in * jnp.dtype(w_sm.dtype).itemsize,
    )

    out_flat = pl.pallas_call(
        gtconv_kernel,
        out_shape=jax.ShapeDtypeStruct((C_out, NN), A.dtype),
        grid_spec=pltpu.PrefetchScalarGridSpec(
            num_scalar_prefetch=0,
            grid=grid,
            in_specs=[
                pl.BlockSpec((C_out, C_in), lambda j: (0, 0)),
                pl.BlockSpec((C_in, tile_nn), lambda j: (0, j)),
            ],
            out_specs=pl.BlockSpec((C_out, tile_nn), lambda j: (0, j)),
        ),
        compiler_params=pltpu.CompilerParams(
            dimension_semantics=("parallel",),
            vmem_limit_bytes=32 * 1024 * 1024,
        ),
        cost_estimate=cost,
    )(w_sm, a_flat)

    return out_flat.reshape(C_out, N, M)


if __name__ == "__main__":
    # Small GTN-like shapes: 5 edge types, 2 output meta-path channels, 16 nodes.
    in_channels, out_channels, N = 5, 2, 16

    key = jax.random.PRNGKey(0)
    A = jax.random.uniform(key, (in_channels, N, N), dtype=jnp.float32)

    # Deterministic parameter init per GTConv.reset_parameters():
    #   nn.init.constant_(self.weight, 0.1); bias is None.
    # The `scale` parameter (0.1, non-trainable) is unused in forward.
    weight = jnp.full((out_channels, in_channels, 1, 1), 0.1, dtype=jnp.float32)

    # Pure-JAX reference for the exact PyTorch semantics.
    w_sm = jax.nn.softmax(weight.reshape(out_channels, in_channels), axis=-1)
    ref = jnp.sum(A[None, :, :, :] * w_sm[:, :, None, None], axis=1)

    # 1) f32 path: exact module semantics (precision=HIGHEST on the MXU dot).
    out = jax.block_until_ready(gtconv_forward(A, weight))
    assert out.shape == (out_channels, N, N), out.shape
    assert out.dtype == ref.dtype
    assert jnp.allclose(out, ref, atol=1e-5, rtol=1e-5), float(
        jnp.max(jnp.abs(out - ref)))

    # 2) bf16 storage path: halves HBM traffic on this bandwidth-bound kernel.
    #    The cast is done here, once, outside the hot path (as a model would).
    A_bf16 = A.astype(jnp.bfloat16)
    out_bf16 = jax.block_until_ready(gtconv_forward(A_bf16, weight))
    assert out_bf16.dtype == jnp.bfloat16
    assert jnp.allclose(out_bf16.astype(jnp.float32), ref, atol=2e-2, rtol=2e-2)

    # 3) Ragged flattened axis (N*N % 128 != 0) with a tiny VMEM budget to force
    #    a multi-step grid -> exercises the masked last-block writeback path
    #    that replaced the wrapper-side jnp.pad / crop.
    N2 = 12
    A2 = jax.random.uniform(
        jax.random.PRNGKey(1), (in_channels, N2, N2), dtype=jnp.float32)
    ref2 = jnp.sum(A2[None, :, :, :] * w_sm[:, :, None, None], axis=1)
    out2 = jax.block_until_ready(
        gtconv_forward(A2, weight, vmem_budget_bytes=128 * 128))
    assert out2.shape == (out_channels, N2, N2), out2.shape
    assert jnp.allclose(out2, ref2, atol=1e-5, rtol=1e-5), float(
        jnp.max(jnp.abs(out2 - ref2)))

    print("KERNEL_OK")
</pallas_src>

<mosaic_0001>
module attributes {stable_mosaic.version = 11 : i64} {
  func.func @gtconv_kernel(%arg0: i32, %arg1: memref<2x5xf32, #tpu.memory_space<vmem>>, %arg2: memref<5x256xf32, #tpu.memory_space<vmem>>, %arg3: memref<2x256xf32, #tpu.memory_space<vmem>>) attributes {dimension_semantics = [#tpu.dimension_semantics<parallel>], iteration_bounds = array<i64: 1>, scalar_prefetch = 0 : i64, scratch_operands = 0 : i64, tpu.core_type = #tpu.core_type<tc>, window_params = [{pipeline_mode = #tpu.pipeline_mode<synchronous>, transform_indices = @transform_0, window_bounds = array<i64: 2, 5>}, {transform_indices = @transform_1, window_bounds = array<i64: 5, 256>}, {transform_indices = @transform_2, window_bounds = array<i64: 2, 256>}]} {
    %c0 = arith.constant 0 : index
    %c0_0 = arith.constant 0 : index
    %0 = vector.load %arg1[%c0, %c0_0] : memref<2x5xf32, #tpu.memory_space<vmem>>, vector<2x5xf32>
    %c0_1 = arith.constant 0 : index
    %c0_2 = arith.constant 0 : index
    %1 = vector.load %arg2[%c0_1, %c0_2] : memref<5x256xf32, #tpu.memory_space<vmem>>, vector<5x256xf32>
    %cst = arith.constant dense<0.000000e+00> : vector<2x256xf32>
    %2 = tpu.matmul %0, %1, %cst {dimension_numbers = #tpu.dot_dimension_numbers<[1], [0], [0], [1], [0, 0, 1, 1], [], []>, precision = #tpu.contract_precision<fp32>} : vector<2x5xf32>, vector<5x256xf32>, vector<2x256xf32> -> vector<2x256xf32>
    %c0_3 = arith.constant 0 : index
    %c0_4 = arith.constant 0 : index
    %3 = vector.load %arg3[%c0_3, %c0_4] : memref<2x256xf32, #tpu.memory_space<vmem>>, vector<2x256xf32>
    tpu.vector_store %arg3[%c0_3, %c0_4], %2 {strides = array<i32>} : memref<2x256xf32, #tpu.memory_space<vmem>>, vector<2x256xf32>,
    return
  }
  func.func @transform_0(%arg0: i32) -> (i32, i32) {
    %c0_i32 = arith.constant 0 : i32
    %c0_i32_0 = arith.constant 0 : i32
    %c0_i32_1 = arith.constant 0 : i32
    return %c0_i32, %c0_i32_0 : i32, i32
  }
  func.func @transform_1(%arg0: i32) -> (i32, i32) {
    %c0_i32 = arith.constant 0 : i32
    %c0_i32_0 = arith.constant 0 : i32
    return %c0_i32, %arg0 : i32, i32
  }
  func.func @transform_2(%arg0: i32) -> (i32, i32) {
    %c0_i32 = arith.constant 0 : i32
    %c0_i32_0 = arith.constant 0 : i32
    return %c0_i32, %arg0 : i32, i32
  }
}

</mosaic_0001>

<llo_original>
// kernel: tpu_custom_call.1
$region0: #{tpu_custom_call.1}
  #allocation0 [shape = 'u32[]', space=smem, size = 0x4, offset = 0x4, fixed_abs, tag = 'smem constant byte address 0x4 - core index']
  #allocation1 [shape = 'u32[144,128]{1,0:T(1,128)}', space=vmem, size = 0x12000, scoped, tag = 'internal scratch']
  %s0 = inlined_call_operand.hbm [shape: f32[2,5], index: 0, kind: input, shape index: {}]
  %s1 = inlined_call_operand.hbm [shape: f32[5,256], index: 1, kind: input, shape index: {}]
  %s2 = inlined_call_operand.hbm [shape: f32[2,256], index: 2, kind: output, shape index: {}]
  %s3 = sld [smem:[#allocation0]]
  $region26: #{tpu_custom_call.1} parent=0
    _
  %s5 = ssub.s32 1, %s3
  %s6 = scalar_select 0, %s5, %s3
  $region1: #{tpu_custom_call.1} parent=0
    #allocation2 [shape = 'u8[1024]{0}', space=vmem, size = 0x400, scoped, tag = 'input window, operand 0, single buffered']
    #allocation3 [shape = 's32[1]{0}', space=sflag, size = 0x4, scoped, tag = 'scoped memory for tpu_custom_call.1']
    #allocation4 [shape = 's32[1]{0}', space=sflag, size = 0x4, scoped, tag = 'scoped memory for tpu_custom_call.1']
    #allocation5 [shape = 'u8[8192]{0}', space=vmem, size = 0x2000, scoped, tag = 'input window, operand 1, single buffered']
    #allocation6 [shape = 's32[1]{0}', space=sflag, size = 0x4, scoped, tag = 'scoped memory for tpu_custom_call.1']
    #allocation7 [shape = 'u8[2048]{0}', space=vmem, size = 0x800, scoped, tag = 'output window, operand 0, single buffered']
    %7 = vsyncpa [#allocation3], 0
    %8 = vsyncpa [#allocation6], 0
    %9 = vsyncpa [#allocation4], 0
    // Predicated region
    $region2: #{tpu_custom_call.1} parent=1 // pred_check
      _
    $region3: #{tpu_custom_call.1} parent=1 // pred_check_branch
      %11 = sbr.rel (0) target = $region5
    $region4: #{tpu_custom_call.1} parent=1 // pred_region
      %s13 = ssub.s32 32, 32
      %14 = vsyncadd [#allocation3], %s13
      %s16 = sshll.u32 [#allocation2], 4
      %s17 = int_to_ptr.vmem [resolvable:$true] %s16
      %19 = dma.hbm_to_vmem [thread:$0]  %s0, 32, %s17, [#allocation3]
    $region5: #{tpu_custom_call.1} parent=1 // pred_fallthru
      _
    // Predicated region
    $region6: #{tpu_custom_call.1} parent=1 // pred_check
      _
    $region7: #{tpu_custom_call.1} parent=1 // pred_check_branch
      %21 = sbr.rel (0) target = $region9
    $region8: #{tpu_custom_call.1} parent=1 // pred_region
      %s23 = ssub.s32 256, 256
      %24 = vsyncadd [#allocation6], %s23
      %s26 = sshll.u32 [#allocation5], 4
      %s27 = int_to_ptr.vmem [resolvable:$true] %s26
      %29 = dma.hbm_to_vmem [thread:$0]  %s1, 256, %s27, [#allocation6]
    $region9: #{tpu_custom_call.1} parent=1 // pred_fallthru
      _
    // Predicated region
    $region10: #{tpu_custom_call.1} parent=1 // pred_check
      _
    $region11: #{tpu_custom_call.1} parent=1 // pred_check_branch
      %31 = sbr.rel (0) target = $region13
    $region12: #{tpu_custom_call.1} parent=1 // pred_region
      %32 = dma.done [#allocation3], 32
    $region13: #{tpu_custom_call.1} parent=1 // pred_fallthru
      _
    // Predicated region
    $region14: #{tpu_custom_call.1} parent=1 // pred_check
      _
    $region15: #{tpu_custom_call.1} parent=1 // pred_check_branch
      %34 = sbr.rel (0) target = $region17
    $region16: #{tpu_custom_call.1} parent=1 // pred_region
      %35 = dma.done [#allocation6], 256
    $region17: #{tpu_custom_call.1} parent=1 // pred_fallthru
      _
    %v36 = vld [vmem:[#allocation2] sm:$0x3]
    %v37 = vld [vmem:[#allocation5] sm:$0x1f]
    %v38 = vld [vmem:[#allocation5 + $0x8] sm:$0x1f]
    %vm39 = vcmask 39936
    %v41 = vsel %vm39, %v36, 0
    %vm43 = vcmask 1044480
    %v45 = vsel %vm43, %v37, 0
    %v48 = vsel %vm43, %v38, 0
    %v50 = vand.u32 %v48, 4294901760
    %51 = vmatprep.subr.mxu0 %v50
    %v52 = vand.u32 %v45, 4294901760
    %53 = vmatpush1.msra.mxu0 %v52
    %54 = vmatprep.subr.mxu0 0.0
    %55 = vmatpush1.msra.mxu0 0.0
    %56 = vmatprep.subr.mxu0 0.0
    %57 = vmatpush1.msra.mxu0 0.0
    %58 = vmatprep.subr.mxu0 0.0
    %59 = vmatpush1.msra.mxu0 0.0
    %60 = vmatprep.subr.mxu0 0.0
    %61 = vmatpush1.msra.mxu0 0.0
    %62 = vmatprep.subr.mxu0 0.0
    %63 = vmatpush1.msra.mxu0 0.0
    %64 = vmatprep.subr.mxu0 0.0
    %65 = vmatpush1.msra.mxu0 0.0
    %66 = vmatprep.subr.mxu0 0.0
    %67 = vmatpush1.msra.mxu0 0.0
    %68 = vmatprep.subr.mxu0 0.0
    %69 = vmatpush1.msra.mxu0 0.0
    %70 = vmatprep.subr.mxu0 0.0
    %71 = vmatpush1.msra.mxu0 0.0
    %72 = vmatprep.subr.mxu0 0.0
    %73 = vmatpush1.msra.mxu0 0.0
    %74 = vmatprep.subr.mxu0 0.0
    %75 = vmatpush1.msra.mxu0 0.0
    %76 = vmatprep.subr.mxu0 0.0
    %77 = vmatpush1.msra.mxu0 0.0
    %78 = vmatprep.subr.mxu0 0.0
    %79 = vmatpush1.msra.mxu0 0.0
    %80 = vmatprep.subr.mxu0 0.0
    %81 = vmatpush1.msra.mxu0 0.0
    %82 = vmatprep.subr.mxu0 0.0
    %83 = vmatpush1.msra.mxu0 0.0
    %84 = vmatprep.subr.mxu0 0.0
    %85 = vmatpush1.msra.mxu0 0.0
    %86 = vmatprep.subr.mxu0 0.0
    %87 = vmatpush1.msra.mxu0 0.0
    %88 = vmatprep.subr.mxu0 0.0
    %89 = vmatpush1.msra.mxu0 0.0
    %90 = vmatprep.subr.mxu0 0.0
    %91 = vmatpush1.msra.mxu0 0.0
    %92 = vmatprep.subr.mxu0 0.0
    %93 = vmatpush1.msra.mxu0 0.0
    %94 = vmatprep.subr.mxu0 0.0
    %95 = vmatpush1.msra.mxu0 0.0
    %96 = vmatprep.subr.mxu0 0.0
    %97 = vmatpush1.msra.mxu0 0.0
    %98 = vmatprep.subr.mxu0 0.0
    %99 = vmatpush1.msra.mxu0 0.0
    %100 = vmatprep.subr.mxu0 0.0
    %101 = vmatpush1.msra.mxu0 0.0
    %102 = vmatprep.subr.mxu0 0.0
    %103 = vmatpush1.msra.mxu0 0.0
    %104 = vmatprep.subr.mxu0 0.0
    %105 = vmatpush1.msra.mxu0 0.0
    %106 = vmatprep.subr.mxu0 0.0
    %107 = vmatpush1.msra.mxu0 0.0
    %108 = vmatprep.subr.mxu0 0.0
    %109 = vmatpush1.msra.mxu0 0.0
    %110 = vmatprep.subr.mxu0 0.0
    %111 = vmatpush1.msra.mxu0 0.0
    %112 = vmatprep.subr.mxu0 0.0
    %113 = vmatpush1.msra.mxu0 0.0
    %114 = vmatprep.subr.mxu0 0.0
    %115 = vmatpush1.msra.mxu0 0.0
    %116 = vmatprep.mubr.f32.mxu0 0.0
    %v117 = vand.u32 %v41, 4294901760
    %v118 = vsub.f32 %v41, %v117
    %v119 = vand.u32 %v118, 4294901760
    %v120 = vsub.f32 %v118, %v119
    %v121 = vand.u32 %v120, 4294901760
    %122 = vmatmul.mubr.f32.gmra.mrb[0].mxu0 %v121
    %v123 = vpop.f32.mrb[0].mxu0
    %v124 = vadd.f32 0.0, %v123
    %v125 = vpop.f32.mrb[0].mxu0
    %v126 = vadd.f32 0.0, %v125
    %127 = vdwg.mxu0
    %v128 = vand.u32 %v48, 4294901760
    %v129 = vsub.f32 %v48, %v128
    %v130 = vand.u32 %v129, 4294901760
    %v131 = vsub.f32 %v129, %v130
    %v132 = vand.u32 %v131, 4294901760
    %133 = vmatprep.subr.mxu0 %v132
    %v134 = vand.u32 %v45, 4294901760
    %v135 = vsub.f32 %v45, %v134
    %v136 = vand.u32 %v135, 4294901760
    %v137 = vsub.f32 %v135, %v136
    %v138 = vand.u32 %v137, 4294901760
    %139 = vmatpush1.msra.mxu0 %v138
    %140 = vmatprep.subr.mxu0 0.0
    %141 = vmatpush1.msra.mxu0 0.0
    %142 = vmatprep.subr.mxu0 0.0
    %143 = vmatpush1.msra.mxu0 0.0
    %144 = vmatprep.subr.mxu0 0.0
    %145 = vmatpush1.msra.mxu0 0.0
    %146 = vmatprep.subr.mxu0 0.0
    %147 = vmatpush1.msra.mxu0 0.0
    %148 = vmatprep.subr.mxu0 0.0
    %149 = vmatpush1.msra.mxu0 0.0
    %150 = vmatprep.subr.mxu0 0.0
    %151 = vmatpush1.msra.mxu0 0.0
    %152 = vmatprep.subr.mxu0 0.0
    %153 = vmatpush1.msra.mxu0 0.0
    %154 = vmatprep.subr.mxu0 0.0
    %155 = vmatpush1.msra.mxu0 0.0
    %156 = vmatprep.subr.mxu0 0.0
    %157 = vmatpush1.msra.mxu0 0.0
    %158 = vmatprep.subr.mxu0 0.0
    %159 = vmatpush1.msra.mxu0 0.0
    %160 = vmatprep.subr.mxu0 0.0
    %161 = vmatpush1.msra.mxu0 0.0
    %162 = vmatprep.subr.mxu0 0.0
    %163 = vmatpush1.msra.mxu0 0.0
    %164 = vmatprep.subr.mxu0 0.0
    %165 = vmatpush1.msra.mxu0 0.0
    %166 = vmatprep.subr.mxu0 0.0
    %167 = vmatpush1.msra.mxu0 0.0
    %168 = vmatprep.subr.mxu0 0.0
    %169 = vmatpush1.msra.mxu0 0.0
    %170 = vmatprep.subr.mxu0 0.0
    %171 = vmatpush1.msra.mxu0 0.0
    %172 = vmatprep.subr.mxu0 0.0
    %173 = vmatpush1.msra.mxu0 0.0
    %174 = vmatprep.subr.mxu0 0.0
    %175 = vmatpush1.msra.mxu0 0.0
    %176 = vmatprep.subr.mxu0 0.0
    %177 = vmatpush1.msra.mxu0 0.0
    %178 = vmatprep.subr.mxu0 0.0
    %179 = vmatpush1.msra.mxu0 0.0
    %180 = vmatprep.subr.mxu0 0.0
    %181 = vmatpush1.msra.mxu0 0.0
    %182 = vmatprep.subr.mxu0 0.0
    %183 = vmatpush1.msra.mxu0 0.0
    %184 = vmatprep.subr.mxu0 0.0
    %185 = vmatpush1.msra.mxu0 0.0
    %186 = vmatprep.subr.mxu0 0.0
    %187 = vmatpush1.msra.mxu0 0.0
    %188 = vmatprep.subr.mxu0 0.0
    %189 = vmatpush1.msra.mxu0 0.0
    %190 = vmatprep.subr.mxu0 0.0
    %191 = vmatpush1.msra.mxu0 0.0
    %192 = vmatprep.subr.mxu0 0.0
    %193 = vmatpush1.msra.mxu0 0.0
    %194 = vmatprep.subr.mxu0 0.0
    %195 = vmatpush1.msra.mxu0 0.0
    %196 = vmatprep.subr.mxu0 0.0
    %197 = vmatpush1.msra.mxu0 0.0
    %198 = vmatprep.subr.mxu0 0.0
    %199 = vmatpush1.msra.mxu0 0.0
    %200 = vmatprep.subr.mxu0 0.0
    %201 = vmatpush1.msra.mxu0 0.0
    %202 = vmatprep.mubr.f32.mxu0 0.0
    %v203 = vand.u32 %v41, 4294901760
    %204 = vmatmul.mubr.f32.gmra.mrb[0].mxu0 %v203
    %v205 = vpop.f32.mrb[0].mxu0
    %v206 = vadd.f32 %v124, %v205
    %v207 = vpop.f32.mrb[0].mxu0
    %v208 = vadd.f32 %v126, %v207
    %209 = vdwg.mxu0
    %v210 = vand.u32 %v48, 4294901760
    %v211 = vsub.f32 %v48, %v210
    %212 = vmatprep.subr.mxu0 %v211
    %v213 = vand.u32 %v45, 4294901760
    %v214 = vsub.f32 %v45, %v213
    %215 = vmatpush1.msra.mxu0 %v214
    %216 = vmatprep.subr.mxu0 0.0
    %217 = vmatpush1.msra.mxu0 0.0
    %218 = vmatprep.subr.mxu0 0.0
    %219 = vmatpush1.msra.mxu0 0.0
    %220 = vmatprep.subr.mxu0 0.0
    %221 = vmatpush1.msra.mxu0 0.0
    %222 = vmatprep.subr.mxu0 0.0
    %223 = vmatpush1.msra.mxu0 0.0
    %224 = vmatprep.subr.mxu0 0.0
    %225 = vmatpush1.msra.mxu0 0.0
    %226 = vmatprep.subr.mxu0 0.0
    %227 = vmatpush1.msra.mxu0 0.0
    %228 = vmatprep.subr.mxu0 0.0
    %229 = vmatpush1.msra.mxu0 0.0
    %230 = vmatprep.subr.mxu0 0.0
    %231 = vmatpush1.msra.mxu0 0.0
    %232 = vmatprep.subr.mxu0 0.0
    %233 = vmatpush1.msra.mxu0 0.0
    %234 = vmatprep.subr.mxu0 0.0
    %235 = vmatpush1.msra.mxu0 0.0
    %236 = vmatprep.subr.mxu0 0.0
    %237 = vmatpush1.msra.mxu0 0.0
    %238 = vmatprep.subr.mxu0 0.0
    %239 = vmatpush1.msra.mxu0 0.0
    %240 = vmatprep.subr.mxu0 0.0
    %241 = vmatpush1.msra.mxu0 0.0
    %242 = vmatprep.subr.mxu0 0.0
    %243 = vmatpush1.msra.mxu0 0.0
    %244 = vmatprep.subr.mxu0 0.0
    %245 = vmatpush1.msra.mxu0 0.0
    %246 = vmatprep.subr.mxu0 0.0
    %247 = vmatpush1.msra.mxu0 0.0
    %248 = vmatprep.subr.mxu0 0.0
    %249 = vmatpush1.msra.mxu0 0.0
    %250 = vmatprep.subr.mxu0 0.0
    %251 = vmatpush1.msra.mxu0 0.0
    %252 = vmatprep.subr.mxu0 0.0
    %253 = vmatpush1.msra.mxu0 0.0
    %254 = vmatprep.subr.mxu0 0.0
    %255 = vmatpush1.msra.mxu0 0.0
    %256 = vmatprep.subr.mxu0 0.0
    %257 = vmatpush1.msra.mxu0 0.0
    %258 = vmatprep.subr.mxu0 0.0
    %259 = vmatpush1.msra.mxu0 0.0
    %260 = vmatprep.subr.mxu0 0.0
    %261 = vmatpush1.msra.mxu0 0.0
    %262 = vmatprep.subr.mxu0 0.0
    %263 = vmatpush1.msra.mxu0 0.0
    %264 = vmatprep.subr.mxu0 0.0
    %265 = vmatpush1.msra.mxu0 0.0
    %266 = vmatprep.subr.mxu0 0.0
    %267 = vmatpush1.msra.mxu0 0.0
    %268 = vmatprep.subr.mxu0 0.0
    %269 = vmatpush1.msra.mxu0 0.0
    %270 = vmatprep.subr.mxu0 0.0
    %271 = vmatpush1.msra.mxu0 0.0
    %272 = vmatprep.subr.mxu0 0.0
    %273 = vmatpush1.msra.mxu0 0.0
    %274 = vmatprep.subr.mxu0 0.0
    %275 = vmatpush1.msra.mxu0 0.0
    %276 = vmatprep.subr.mxu0 0.0
    %277 = vmatpush1.msra.mxu0 0.0
    %278 = vmatprep.mubr.f32.mxu0 0.0
    %v279 = vand.u32 %v41, 4294901760
    %v280 = vsub.f32 %v41, %v279
    %281 = vmatmul.mubr.f32.gmra.mrb[0].mxu0 %v280
    %v282 = vpop.f32.mrb[0].mxu0
    %v283 = vadd.f32 %v206, %v282
    %v284 = vpop.f32.mrb[0].mxu0
    %v285 = vadd.f32 %v208, %v284
    %286 = vdwg.mxu0
    %v287 = vand.u32 %v48, 4294901760
    %288 = vmatprep.subr.mxu0 %v287
    %v289 = vand.u32 %v45, 4294901760
    %290 = vmatpush1.msra.mxu0 %v289
    %291 = vmatprep.subr.mxu0 0.0
    %292 = vmatpush1.msra.mxu0 0.0
    %293 = vmatprep.subr.mxu0 0.0
    %294 = vmatpush1.msra.mxu0 0.0
    %295 = vmatprep.subr.mxu0 0.0
    %296 = vmatpush1.msra.mxu0 0.0
    %297 = vmatprep.subr.mxu0 0.0
    %298 = vmatpush1.msra.mxu0 0.0
    %299 = vmatprep.subr.mxu0 0.0
    %300 = vmatpush1.msra.mxu0 0.0
    %301 = vmatprep.subr.mxu0 0.0
    %302 = vmatpush1.msra.mxu0 0.0
    %303 = vmatprep.subr.mxu0 0.0
    %304 = vmatpush1.msra.mxu0 0.0
    %305 = vmatprep.subr.mxu0 0.0
    %306 = vmatpush1.msra.mxu0 0.0
    %307 = vmatprep.subr.mxu0 0.0
    %308 = vmatpush1.msra.mxu0 0.0
    %309 = vmatprep.subr.mxu0 0.0
    %310 = vmatpush1.msra.mxu0 0.0
    %311 = vmatprep.subr.mxu0 0.0
    %312 = vmatpush1.msra.mxu0 0.0
    %313 = vmatprep.subr.mxu0 0.0
    %314 = vmatpush1.msra.mxu0 0.0
    %315 = vmatprep.subr.mxu0 0.0
    %316 = vmatpush1.msra.mxu0 0.0
    %317 = vmatprep.subr.mxu0 0.0
    %318 = vmatpush1.msra.mxu0 0.0
    %319 = vmatprep.subr.mxu0 0.0
    %320 = vmatpush1.msra.mxu0 0.0
    %321 = vmatprep.subr.mxu0 0.0
    %322 = vmatpush1.msra.mxu0 0.0
    %323 = vmatprep.subr.mxu0 0.0
    %324 = vmatpush1.msra.mxu0 0.0
    %325 = vmatprep.subr.mxu0 0.0
    %326 = vmatpush1.msra.mxu0 0.0
    %327 = vmatprep.subr.mxu0 0.0
    %328 = vmatpush1.msra.mxu0 0.0
    %329 = vmatprep.subr.mxu0 0.0
    %330 = vmatpush1.msra.mxu0 0.0
    %331 = vmatprep.subr.mxu0 0.0
    %332 = vmatpush1.msra.mxu0 0.0
    %333 = vmatprep.subr.mxu0 0.0
    %334 = vmatpush1.msra.mxu0 0.0
    %335 = vmatprep.subr.mxu0 0.0
    %336 = vmatpush1.msra.mxu0 0.0
    %337 = vmatprep.subr.mxu0 0.0
    %338 = vmatpush1.msra.mxu0 0.0
    %339 = vmatprep.subr.mxu0 0.0
    %340 = vmatpush1.msra.mxu0 0.0
    %341 = vmatprep.subr.mxu0 0.0
    %342 = vmatpush1.msra.mxu0 0.0
    %343 = vmatprep.subr.mxu0 0.0
    %344 = vmatpush1.msra.mxu0 0.0
    %345 = vmatprep.subr.mxu0 0.0
    %346 = vmatpush1.msra.mxu0 0.0
    %347 = vmatprep.subr.mxu0 0.0
    %348 = vmatpush1.msra.mxu0 0.0
    %349 = vmatprep.subr.mxu0 0.0
    %350 = vmatpush1.msra.mxu0 0.0
    %351 = vmatprep.subr.mxu0 0.0
    %352 = vmatpush1.msra.mxu0 0.0
    %353 = vmatprep.mubr.f32.mxu0 0.0
    %v354 = vand.u32 %v41, 4294901760
    %v355 = vsub.f32 %v41, %v354
    %v356 = vand.u32 %v355, 4294901760
    %357 = vmatmul.mubr.f32.gmra.mrb[0].mxu0 %v356
    %v358 = vpop.f32.mrb[0].mxu0
    %v359 = vadd.f32 %v283, %v358
    %v360 = vpop.f32.mrb[0].mxu0
    %v361 = vadd.f32 %v285, %v360
    %362 = vdwg.mxu0
    %v363 = vand.u32 %v48, 4294901760
    %v364 = vsub.f32 %v48, %v363
    %v365 = vand.u32 %v364, 4294901760
    %366 = vmatprep.subr.mxu0 %v365
    %v367 = vand.u32 %v45, 4294901760
    %v368 = vsub.f32 %v45, %v367
    %v369 = vand.u32 %v368, 4294901760
    %370 = vmatpush1.msra.mxu0 %v369
    %371 = vmatprep.subr.mxu0 0.0
    %372 = vmatpush1.msra.mxu0 0.0
    %373 = vmatprep.subr.mxu0 0.0
    %374 = vmatpush1.msra.mxu0 0.0
    %375 = vmatprep.subr.mxu0 0.0
    %376 = vmatpush1.msra.mxu0 0.0
    %377 = vmatprep.subr.mxu0 0.0
    %378 = vmatpush1.msra.mxu0 0.0
    %379 = vmatprep.subr.mxu0 0.0
    %380 = vmatpush1.msra.mxu0 0.0
    %381 = vmatprep.subr.mxu0 0.0
    %382 = vmatpush1.msra.mxu0 0.0
    %383 = vmatprep.subr.mxu0 0.0
    %384 = vmatpush1.msra.mxu0 0.0
    %385 = vmatprep.subr.mxu0 0.0
    %386 = vmatpush1.msra.mxu0 0.0
    %387 = vmatprep.subr.mxu0 0.0
    %388 = vmatpush1.msra.mxu0 0.0
    %389 = vmatprep.subr.mxu0 0.0
    %390 = vmatpush1.msra.mxu0 0.0
    %391 = vmatprep.subr.mxu0 0.0
    %392 = vmatpush1.msra.mxu0 0.0
    %393 = vmatprep.subr.mxu0 0.0
    %394 = vmatpush1.msra.mxu0 0.0
    %395 = vmatprep.subr.mxu0 0.0
    %396 = vmatpush1.msra.mxu0 0.0
    %397 = vmatprep.subr.mxu0 0.0
    %398 = vmatpush1.msra.mxu0 0.0
    %399 = vmatprep.subr.mxu0 0.0
    %400 = vmatpush1.msra.mxu0 0.0
    %401 = vmatprep.subr.mxu0 0.0
    %402 = vmatpush1.msra.mxu0 0.0
    %403 = vmatprep.subr.mxu0 0.0
    %404 = vmatpush1.msra.mxu0 0.0
    %405 = vmatprep.subr.mxu0 0.0
    %406 = vmatpush1.msra.mxu0 0.0
    %407 = vmatprep.subr.mxu0 0.0
    %408 = vmatpush1.msra.mxu0 0.0
    %409 = vmatprep.subr.mxu0 0.0
    %410 = vmatpush1.msra.mxu0 0.0
    %411 = vmatprep.subr.mxu0 0.0
    %412 = vmatpush1.msra.mxu0 0.0
    %413 = vmatprep.subr.mxu0 0.0
    %414 = vmatpush1.msra.mxu0 0.0
    %415 = vmatprep.subr.mxu0 0.0
    %416 = vmatpush1.msra.mxu0 0.0
    %417 = vmatprep.subr.mxu0 0.0
    %418 = vmatpush1.msra.mxu0 0.0
    %419 = vmatprep.subr.mxu0 0.0
    %420 = vmatpush1.msra.mxu0 0.0
    %421 = vmatprep.subr.mxu0 0.0
    %422 = vmatpush1.msra.mxu0 0.0
    %423 = vmatprep.subr.mxu0 0.0
    %424 = vmatpush1.msra.mxu0 0.0
    %425 = vmatprep.subr.mxu0 0.0
    %426 = vmatpush1.msra.mxu0 0.0
    %427 = vmatprep.subr.mxu0 0.0
    %428 = vmatpush1.msra.mxu0 0.0
    %429 = vmatprep.subr.mxu0 0.0
    %430 = vmatpush1.msra.mxu0 0.0
    %431 = vmatprep.subr.mxu0 0.0
    %432 = vmatpush1.msra.mxu0 0.0
    %433 = vmatprep.mubr.f32.mxu0 0.0
    %v434 = vand.u32 %v41, 4294901760
    %435 = vmatmul.mubr.f32.gmra.mrb[0].mxu0 %v434
    %v436 = vpop.f32.mrb[0].mxu0
    %v437 = vadd.f32 %v359, %v436
    %v438 = vpop.f32.mrb[0].mxu0
    %v439 = vadd.f32 %v361, %v438
    %440 = vdwg.mxu0
    %v441 = vand.u32 %v48, 4294901760
    %442 = vmatprep.subr.mxu0 %v441
    %v443 = vand.u32 %v45, 4294901760
    %444 = vmatpush1.msra.mxu0 %v443
    %445 = vmatprep.subr.mxu0 0.0
    %446 = vmatpush1.msra.mxu0 0.0
    %447 = vmatprep.subr.mxu0 0.0
    %448 = vmatpush1.msra.mxu0 0.0
    %449 = vmatprep.subr.mxu0 0.0
    %450 = vmatpush1.msra.mxu0 0.0
    %451 = vmatprep.subr.mxu0 0.0
    %452 = vmatpush1.msra.mxu0 0.0
    %453 = vmatprep.subr.mxu0 0.0
    %454 = vmatpush1.msra.mxu0 0.0
    %455 = vmatprep.subr.mxu0 0.0
    %456 = vmatpush1.msra.mxu0 0.0
    %457 = vmatprep.subr.mxu0 0.0
    %458 = vmatpush1.msra.mxu0 0.0
    %459 = vmatprep.subr.mxu0 0.0
    %460 = vmatpush1.msra.mxu0 0.0
    %461 = vmatprep.subr.mxu0 0.0
    %462 = vmatpush1.msra.mxu0 0.0
    %463 = vmatprep.subr.mxu0 0.0
    %464 = vmatpush1.msra.mxu0 0.0
    %465 = vmatprep.subr.mxu0 0.0
    %466 = vmatpush1.msra.mxu0 0.0
    %467 = vmatprep.subr.mxu0 0.0
    %468 = vmatpush1.msra.mxu0 0.0
    %469 = vmatprep.subr.mxu0 0.0
    %470 = vmatpush1.msra.mxu0 0.0
    %471 = vmatprep.subr.mxu0 0.0
    %472 = vmatpush1.msra.mxu0 0.0
    %473 = vmatprep.subr.mxu0 0.0
    %474 = vmatpush1.msra.mxu0 0.0
    %475 = vmatprep.subr.mxu0 0.0
    %476 = vmatpush1.msra.mxu0 0.0
    %477 = vmatprep.subr.mxu0 0.0
    %478 = vmatpush1.msra.mxu0 0.0
    %479 = vmatprep.subr.mxu0 0.0
    %480 = vmatpush1.msra.mxu0 0.0
    %481 = vmatprep.subr.mxu0 0.0
    %482 = vmatpush1.msra.mxu0 0.0
    %483 = vmatprep.subr.mxu0 0.0
    %484 = vmatpush1.msra.mxu0 0.0
    %485 = vmatprep.subr.mxu0 0.0
    %486 = vmatpush1.msra.mxu0 0.0
    %487 = vmatprep.subr.mxu0 0.0
    %488 = vmatpush1.msra.mxu0 0.0
    %489 = vmatprep.subr.mxu0 0.0
    %490 = vmatpush1.msra.mxu0 0.0
    %491 = vmatprep.subr.mxu0 0.0
    %492 = vmatpush1.msra.mxu0 0.0
    %493 = vmatprep.subr.mxu0 0.0
    %494 = vmatpush1.msra.mxu0 0.0
    %495 = vmatprep.subr.mxu0 0.0
    %496 = vmatpush1.msra.mxu0 0.0
    %497 = vmatprep.subr.mxu0 0.0
    %498 = vmatpush1.msra.mxu0 0.0
    %499 = vmatprep.subr.mxu0 0.0
    %500 = vmatpush1.msra.mxu0 0.0
    %501 = vmatprep.subr.mxu0 0.0
    %502 = vmatpush1.msra.mxu0 0.0
    %503 = vmatprep.subr.mxu0 0.0
    %504 = vmatpush1.msra.mxu0 0.0
    %505 = vmatprep.subr.mxu0 0.0
    %506 = vmatpush1.msra.mxu0 0.0
    %507 = vmatprep.mubr.f32.mxu0 0.0
    %v508 = vand.u32 %v41, 4294901760
    %509 = vmatmul.mubr.f32.gmra.mrb[0].mxu0 %v508
    %v510 = vpop.f32.mrb[0].mxu0
    %v511 = vadd.f32 %v437, %v510
    %v512 = vpop.f32.mrb[0].mxu0
    %v513 = vadd.f32 %v439, %v512
    %514 = vdwg.mxu0
    %v517 = vcombine.low %v511, %v513
    %v519 = vunpack.c.l.s4 1983009808
    %v520 = vunpack.c.0.s8 %v519
    %v521 = vlaneseq
    %v522 = vshrl.u32 %v521, 7
    %v523 = vsub.s32 %v520, %v522
    %v524 = vrot.slane %v517, %v523
    %526 = vst [vmem:[#allocation7] sm:$0xf] %v524
    // Predicated region
    $region18: #{tpu_custom_call.1} parent=1 // pred_check
      _
    $region19: #{tpu_custom_call.1} parent=1 // pred_check_branch
      %528 = sbr.rel (0) target = $region21
    $region20: #{tpu_custom_call.1} parent=1 // pred_region
      %s530 = ssub.s32 64, 64
      %531 = vsyncadd [#allocation4], %s530
      %s533 = sshll.u32 [#allocation7], 4
      %s534 = int_to_ptr.vmem [resolvable:$true] %s533
      %536 = dma.vmem_to_hbm [thread:$0]  %s534, 64, %s2, [#allocation4]
    $region21: #{tpu_custom_call.1} parent=1 // pred_fallthru
      _
    // Predicated region
    $region22: #{tpu_custom_call.1} parent=1 // pred_check
      _
    $region23: #{tpu_custom_call.1} parent=1 // pred_check_branch
      %538 = sbr.rel (0) target = $region25
    $region24: #{tpu_custom_call.1} parent=1 // pred_region
      %539 = dma.done [#allocation4], 64
    $region25: #{tpu_custom_call.1} parent=1 // pred_fallthru
      _
    %540 = vsyncpa [#allocation3], 1
    %541 = vsyncpa [#allocation6], 1
    %542 = vsyncpa [#allocation4], 1

</llo_original>
